<compile_context>
chip_gen: v7x
topology: tpu7x:2x2x1
jax: 0.10.0
libtpu: 0.0.40
codegen_flags: <defaults>
</compile_context>

<pallas_src>
import math
import jax
import jax.numpy as jnp
from jax import lax
from jax.experimental import pallas as pl
from jax.experimental.pallas import tpu as pltpu

_EPS = 1e-12            # F.normalize default eps
_EPS_SQ = _EPS * _EPS   # 1/max(||a||, eps) == rsqrt(max(sum(a*a), eps^2))

# Tile caps (before the VMEM-budget fit below).
_TM_MAX = 256
_TN_MAX = 512
_TK_MAX = 2048


def _round_up(v, m):
    return ((v + m - 1) // m) * m


def _halve_128(t):
    return max(128, _round_up(t // 2, 128))


def _pad2(a, rows, cols, value=0.0):
    r, c = a.shape
    return jnp.pad(a, ((0, rows - r), (0, cols - c)), constant_values=value)


def _sublane_mult(dtype):
    # sub-32-bit dtypes pack rows along sublanes: round the batch tile so the
    # output tile stays fully packed (8 f32 / 16 bf16 / 32 int8-fp8).
    return max(8, 32 // jnp.dtype(dtype).itemsize)


def _vmem_limit_bytes():
    cap = 64 << 20                      # v7x-safe default (64 MiB per TC)
    try:
        info = pltpu.get_tpu_info()
        cap = int(getattr(info, "vmem_capacity_bytes", cap))
    except Exception:
        pass
    return min((cap * 3) // 4, 96 << 20)


def _fit_tiles(tm, tn, tk, nbp, mm_sz, budget):
    """Shrink (tn first, then tk, then tm) until the double-buffered
    footprint fits the VMEM budget."""
    def footprint(tm_, tn_, tk_):
        return (2 * tm_ * tk_ * mm_sz                 # x blocks
                + 2 * nbp * tn_ * tk_ * mm_sz         # weight blocks
                + 2 * tm_ * tn_ * 4                   # output blocks
                + tm_ * nbp * tn_ * 4                 # f32 accumulator scratch
                + 2 * (tm_ * 4 + nbp * tn_ * 4))      # invx / invw blocks
    while footprint(tm, tn, tk) > budget:
        if tn > 256:
            tn = _halve_128(tn)
        elif tk > 512:
            tk = _halve_128(tk)
        elif tn > 128:
            tn = _halve_128(tn)
        elif tk > 128:
            tk = _halve_128(tk)
        elif tm > 8:
            tm = max(8, tm // 2)
        else:
            break
    return tm, tn, tk


# ----------------------------------------------------------------------------
# Kernels
# ----------------------------------------------------------------------------

def _cosine_kernel(x_ref, w_ref, invx_ref, invw_ref, o_ref, acc_ref):
    """No-reduce path: out = (x @ w.T) * inv||x|| * (sigma * inv||w||)."""
    k = pl.program_id(2)

    @pl.when(k == 0)
    def _init():
        acc_ref[...] = jnp.zeros_like(acc_ref)

    acc_ref[...] += lax.dot_general(
        x_ref[...], w_ref[...], (((1,), (1,)), ((), ())),
        preferred_element_type=jnp.float32)

    @pl.when(k == pl.num_programs(2) - 1)
    def _finalize():
        scale = invx_ref[...] * invw_ref[...]          # (tm,1)*(1,tn)->(tm,tn)
        o_ref[...] = (acc_ref[...] * scale).astype(o_ref.dtype)


def _cosine_reduce_kernel(x_ref, w_ref, invx_ref, invw_ref, sigma_ref,
                          o_ref, acc_ref):
    """to_reduce path: per-proxy cosine sims, softmax over proxies, weighted
    sum, * sigma — single MXU dot per k-step, everything else at writeback."""
    nbp, tn, tk = w_ref.shape
    k = pl.program_id(2)

    @pl.when(k == 0)
    def _init():
        acc_ref[...] = jnp.zeros_like(acc_ref)

    # One big matmul per k-step: (tm, tk) x (nbp*tn, tk)^T -> (tm, nbp*tn).
    w = w_ref[...].reshape(nbp * tn, tk)
    acc_ref[...] += lax.dot_general(
        x_ref[...], w, (((1,), (1,)), ((), ())),
        preferred_element_type=jnp.float32)

    @pl.when(k == pl.num_programs(2) - 1)
    def _finalize():
        inv_x = invx_ref[...]                           # (tm, 1)
        # Scale the accumulator in place once; later passes are pure loads.
        for p in range(nbp):
            sl = slice(p * tn, (p + 1) * tn)
            acc_ref[:, sl] = acc_ref[:, sl] * (inv_x * invw_ref[p:p + 1, :])
        # Running softmax over the (small, static) proxy axis.
        m = acc_ref[:, 0:tn]
        for p in range(1, nbp):
            m = jnp.maximum(m, acc_ref[:, p * tn:(p + 1) * tn])
        denom = jnp.zeros_like(m)
        num = jnp.zeros_like(m)
        for p in range(nbp):
            s = acc_ref[:, p * tn:(p + 1) * tn]
            e = jnp.exp(s - m)
            denom = denom + e
            num = num + e * s
        o_ref[...] = ((num / denom) * sigma_ref[0]).astype(o_ref.dtype)


# ----------------------------------------------------------------------------
# Wrapper: weight-side prepare (cached) + per-call apply
# ----------------------------------------------------------------------------

def prepare_cosine_linear(weight, sigma=None, *, nb_proxy=1, to_reduce=False,
                          matmul_dtype=None):
    """Weight-derived precompute. Call ONCE per weight update and cache the
    result; the per-forward path (cosine_linear_apply) only touches x."""
    P, D = weight.shape
    reduce = bool(to_reduce and nb_proxy > 1)

    sig = (jnp.ones((1,), jnp.float32) if sigma is None
           else jnp.asarray(sigma, jnp.float32).reshape(-1)[:1])

    w32 = weight.astype(jnp.float32)
    invw = lax.rsqrt(jnp.maximum(jnp.sum(w32 * w32, axis=-1), _EPS_SQ))  # (P,)

    mm_dtype = jnp.dtype(matmul_dtype) if matmul_dtype is not None \
        else jnp.dtype(weight.dtype)
    mm_sz = mm_dtype.itemsize

    vmem_limit = _vmem_limit_bytes()
    budget = vmem_limit // 2

    if reduce:
        assert P % nb_proxy == 0, "Shape error"
        C = P // nb_proxy
        N, nbp = C, nb_proxy
    else:
        C = None
        N, nbp = P, 1

    tk = min(_round_up(D, 128), _TK_MAX)
    tn = min(_round_up(N, 128), _TN_MAX)
    tm_cap, tn, tk = _fit_tiles(_TM_MAX, tn, tk, nbp, mm_sz, budget)

    Dp = _round_up(D, tk)
    Np = _round_up(N, tn)

    if reduce:
        # weight row index = class * nb_proxy + proxy -> proxy-major (nbp,C,D)
        w_pm = jnp.transpose(weight.reshape(C, nb_proxy, D), (1, 0, 2))
        w_pm = jnp.pad(w_pm.astype(mm_dtype),
                       ((0, 0), (0, Np - C), (0, Dp - D)))
        invw_pm = jnp.transpose(invw.reshape(C, nb_proxy), (1, 0))  # (nbp, C)
        invw_pm = jnp.pad(invw_pm, ((0, 0), (0, Np - C)), constant_values=1.0)
        w_prep, invw_prep = w_pm, invw_pm
    else:
        w_prep = _pad2(weight.astype(mm_dtype), Np, Dp)
        invw_scaled = (invw * sig[0]).reshape(1, P)     # fold sigma in here
        invw_prep = _pad2(invw_scaled, 1, Np, value=1.0)

    return {
        "reduce": reduce, "nb_proxy": nbp, "P": P, "C": C, "D": D,
        "Dp": Dp, "Np": Np, "tn": tn, "tk": tk, "tm_cap": tm_cap,
        "mm_dtype": mm_dtype, "vmem_limit": vmem_limit,
        "w": w_prep, "invw": invw_prep, "sigma": sig,
    }


def cosine_linear_apply(x, prep):
    """Forward pass using cached weight-side state. Returns {'logits': ...}."""
    B, D = x.shape
    assert D == prep["D"]
    mm_dtype = prep["mm_dtype"]

    sub = _sublane_mult(mm_dtype)
    tm = min(_round_up(B, sub), prep["tm_cap"])
    Bp = _round_up(B, tm)

    tn, tk = prep["tn"], prep["tk"]
    Np, Dp = prep["Np"], prep["Dp"]

    # v7x megacore: keep the parallel grid extents >= 2 when the batch fits in
    # one tile and the class axis can still be split on 128-lane boundaries.
    if Bp // tm == 1 and Np // tn == 1 and tn % 256 == 0:
        tn = tn // 2

    # Tiny O(B*D) reduce done once here instead of once per class tile.
    x32 = x.astype(jnp.float32)
    inv_x = lax.rsqrt(jnp.maximum(
        jnp.sum(x32 * x32, axis=1, keepdims=True), _EPS_SQ))        # (B, 1)
    invx_p = jnp.pad(inv_x, ((0, Bp - B), (0, 0)))
    xp = _pad2(x.astype(mm_dtype), Bp, Dp)

    grid = (Bp // tm, Np // tn, Dp // tk)
    cp = pltpu.CompilerParams(
        dimension_semantics=("parallel", "parallel", "arbitrary"),
        vmem_limit_bytes=prep["vmem_limit"])

    if prep["reduce"]:
        nbp = prep["nb_proxy"]
        out = pl.pallas_call(
            _cosine_reduce_kernel,
            out_shape=jax.ShapeDtypeStruct((Bp, Np), x.dtype),
            grid=grid,
            in_specs=[
                pl.BlockSpec((tm, tk), lambda i, j, k: (i, k)),
                pl.BlockSpec((nbp, tn, tk), lambda i, j, k: (0, j, k)),
                pl.BlockSpec((tm, 1), lambda i, j, k: (i, 0)),
                pl.BlockSpec((nbp, tn), lambda i, j, k: (0, j)),
                pl.BlockSpec(memory_space=pltpu.MemorySpace.SMEM),
            ],
            out_specs=pl.BlockSpec((tm, tn), lambda i, j, k: (i, j)),
            scratch_shapes=[pltpu.VMEM((tm, nbp * tn), jnp.float32)],
            compiler_params=cp,
        )(xp, prep["w"], invx_p, prep["invw"], prep["sigma"])
        out = out[:B, :prep["C"]]
    else:
        out = pl.pallas_call(
            _cosine_kernel,
            out_shape=jax.ShapeDtypeStruct((Bp, Np), x.dtype),
            grid=grid,
            in_specs=[
                pl.BlockSpec((tm, tk), lambda i, j, k: (i, k)),
                pl.BlockSpec((tn, tk), lambda i, j, k: (j, k)),
                pl.BlockSpec((tm, 1), lambda i, j, k: (i, 0)),
                pl.BlockSpec((1, tn), lambda i, j, k: (0, j)),
            ],
            out_specs=pl.BlockSpec((tm, tn), lambda i, j, k: (i, j)),
            scratch_shapes=[pltpu.VMEM((tm, tn), jnp.float32)],
            compiler_params=cp,
        )(xp, prep["w"], invx_p, prep["invw"])
        out = out[:B, :prep["P"]]

    return {"logits": out}


def cosine_linear_forward(x, weight, sigma, *, nb_proxy=1, to_reduce=False):
    """Convenience wrapper matching CosineLinear.forward (prepare + apply).
    For production, call prepare_cosine_linear once and reuse it."""
    prep = prepare_cosine_linear(weight, sigma, nb_proxy=nb_proxy,
                                 to_reduce=to_reduce)
    return cosine_linear_apply(x, prep)


def ref_forward(x, weight, sigma, *, nb_proxy=1, to_reduce=False):
    """Pure-JAX reference matching the PyTorch forward exactly."""
    xn = x / jnp.maximum(jnp.linalg.norm(x, axis=1, keepdims=True), _EPS)
    wn = weight / jnp.maximum(jnp.linalg.norm(weight, axis=1, keepdims=True), _EPS)
    out = xn @ wn.T
    if to_reduce and nb_proxy > 1:
        bs, P = out.shape
        C = P // nb_proxy
        simi = out.reshape(bs, C, nb_proxy)
        att = jax.nn.softmax(simi, axis=-1)
        out = (att * simi).sum(-1)
    return sigma[0] * out


if __name__ == "__main__":
    # Small shapes consistent with the module: batch=8, in_features=32,
    # out_features=4, nb_proxy=2 (so weight is (8, 32)).
    B, in_features, out_features, nb_proxy = 8, 32, 4, 2
    P = out_features * nb_proxy

    key = jax.random.PRNGKey(0)
    kx, kw = jax.random.split(key)

    x = jax.random.normal(kx, (B, in_features), dtype=jnp.float32)

    # reset_parameters(): weight ~ U(-stdv, stdv), stdv = 1/sqrt(in_features); sigma = 1
    stdv = 1.0 / math.sqrt(in_features)
    weight = jax.random.uniform(
        kw, (P, in_features), minval=-stdv, maxval=stdv, dtype=jnp.float32)
    sigma = jnp.array([1.0], dtype=jnp.float32)

    # Weight-side precompute hoisted out of the forward path (done once).
    prep_reduce = prepare_cosine_linear(weight, sigma, nb_proxy=nb_proxy,
                                        to_reduce=True)
    prep_plain = prepare_cosine_linear(weight, sigma, nb_proxy=nb_proxy,
                                       to_reduce=False)

    # to_reduce=True path (normalize + matmul + proxy softmax reduction + sigma)
    out_reduce = cosine_linear_apply(x, prep_reduce)["logits"]
    jax.block_until_ready(out_reduce)
    ref_reduce = ref_forward(x, weight, sigma, nb_proxy=nb_proxy, to_reduce=True)
    assert out_reduce.shape == (B, out_features)
    assert jnp.allclose(out_reduce, ref_reduce, atol=1e-5, rtol=1e-5)

    # default path (no reduce)
    out_plain = cosine_linear_apply(x, prep_plain)["logits"]
    jax.block_until_ready(out_plain)
    ref_plain = ref_forward(x, weight, sigma, nb_proxy=nb_proxy, to_reduce=False)
    assert out_plain.shape == (B, P)
    assert jnp.allclose(out_plain, ref_plain, atol=1e-5, rtol=1e-5)

    print("KERNEL_OK")
</pallas_src>

<mosaic_0001>
module attributes {stable_mosaic.version = 11 : i64} {
  func.func @_cosine_reduce_kernel(%arg0: i32, %arg1: i32, %arg2: i32, %arg3: memref<8x128xf32, #tpu.memory_space<vmem>>, %arg4: memref<2x128x128xf32, #tpu.memory_space<vmem>>, %arg5: memref<8x1xf32, #tpu.memory_space<vmem>>, %arg6: memref<2x128xf32, #tpu.memory_space<vmem>>, %arg7: memref<1xf32, #tpu.memory_space<smem>>, %arg8: memref<8x128xf32, #tpu.memory_space<vmem>>, %arg9: memref<8x256xf32, #tpu.memory_space<vmem>>) attributes {dimension_semantics = [#tpu.dimension_semantics<parallel>, #tpu.dimension_semantics<parallel>, #tpu.dimension_semantics<arbitrary>], iteration_bounds = array<i64: 1, 1, 1>, scalar_prefetch = 0 : i64, scratch_operands = 1 : i64, tpu.core_type = #tpu.core_type<tc>, window_params = [{transform_indices = @transform_0, window_bounds = array<i64: 8, 128>}, {transform_indices = @transform_1, window_bounds = array<i64: 2, 128, 128>}, {transform_indices = @transform_2, window_bounds = array<i64: 8, 1>}, {transform_indices = @transform_3, window_bounds = array<i64: 2, 128>}, {transform_indices = @transform_4, window_bounds = array<i64: 1>}, {transform_indices = @transform_5, window_bounds = array<i64: 8, 128>}]} {
    %c0_i32 = arith.constant 0 : i32
    %0 = arith.cmpi eq, %arg2, %c0_i32 : i32
    %1 = arith.extui %0 : i1 to i32
    %c0_i32_0 = arith.constant 0 : i32
    %2 = arith.cmpi ne, %1, %c0_i32_0 : i32
    scf.if %2 {
      %cst_11 = arith.constant 0.000000e+00 : f32
      %13 = vector.broadcast %cst_11 : f32 to vector<8x256xf32>
      %c0_12 = arith.constant 0 : index
      %c0_13 = arith.constant 0 : index
      %14 = vector.load %arg9[%c0_12, %c0_13] : memref<8x256xf32, #tpu.memory_space<vmem>>, vector<8x256xf32>
      tpu.vector_store %arg9[%c0_12, %c0_13], %13 {strides = array<i32>} : memref<8x256xf32, #tpu.memory_space<vmem>>, vector<8x256xf32>,
    } else {
    }
    %c0 = arith.constant 0 : index
    %c0_1 = arith.constant 0 : index
    %c0_2 = arith.constant 0 : index
    %3 = vector.load %arg4[%c0, %c0_1, %c0_2] : memref<2x128x128xf32, #tpu.memory_space<vmem>>, vector<2x128x128xf32>
    %4 = vector.shape_cast %3 : vector<2x128x128xf32> to vector<256x128xf32>
    %c0_3 = arith.constant 0 : index
    %c0_4 = arith.constant 0 : index
    %5 = vector.load %arg9[%c0_3, %c0_4] : memref<8x256xf32, #tpu.memory_space<vmem>>, vector<8x256xf32>
    %c0_5 = arith.constant 0 : index
    %c0_6 = arith.constant 0 : index
    %6 = vector.load %arg3[%c0_5, %c0_6] : memref<8x128xf32, #tpu.memory_space<vmem>>, vector<8x128xf32>
    %cst = arith.constant dense<0.000000e+00> : vector<8x256xf32>
    %7 = tpu.matmul %6, %4, %cst {dimension_numbers = #tpu.dot_dimension_numbers<[1], [1], [0], [0], [0, 0, 1, 0], [], []>} : vector<8x128xf32>, vector<256x128xf32>, vector<8x256xf32> -> vector<8x256xf32>
    %8 = arith.addf %5, %7 : vector<8x256xf32>
    %c0_7 = arith.constant 0 : index
    %c0_8 = arith.constant 0 : index
    %9 = vector.load %arg9[%c0_7, %c0_8] : memref<8x256xf32, #tpu.memory_space<vmem>>, vector<8x256xf32>
    tpu.vector_store %arg9[%c0_7, %c0_8], %8 {strides = array<i32>} : memref<8x256xf32, #tpu.memory_space<vmem>>, vector<8x256xf32>,
    %c0_i32_9 = arith.constant 0 : i32
    %10 = arith.cmpi eq, %arg2, %c0_i32_9 : i32
    %11 = arith.extui %10 : i1 to i32
    %c0_i32_10 = arith.constant 0 : i32
    %12 = arith.cmpi ne, %11, %c0_i32_10 : i32
    scf.if %12 {
      %c0_11 = arith.constant 0 : index
      %c0_12 = arith.constant 0 : index
      %13 = vector.load %arg5[%c0_11, %c0_12] : memref<8x1xf32, #tpu.memory_space<vmem>>, vector<8x1xf32>
      %c0_13 = arith.constant 0 : index
      %c0_14 = arith.constant 0 : index
      %14 = vector.load %arg9[%c0_13, %c0_14] : memref<8x256xf32, #tpu.memory_space<vmem>>, vector<8x128xf32>
      %c0_15 = arith.constant 0 : index
      %c0_16 = arith.constant 0 : index
      %15 = vector.load %arg6[%c0_15, %c0_16] : memref<2x128xf32, #tpu.memory_space<vmem>>, vector<1x128xf32>
      %16 = vector.broadcast %13 : vector<8x1xf32> to vector<8x128xf32>
      %17 = vector.broadcast %15 : vector<1x128xf32> to vector<8x128xf32>
      %18 = arith.mulf %16, %17 : vector<8x128xf32>
      %19 = arith.mulf %14, %18 : vector<8x128xf32>
      %c0_17 = arith.constant 0 : index
      %c0_18 = arith.constant 0 : index
      %20 = vector.load %arg9[%c0_17, %c0_18] : memref<8x256xf32, #tpu.memory_space<vmem>>, vector<8x128xf32>
      tpu.vector_store %arg9[%c0_17, %c0_18], %19 {strides = array<i32>} : memref<8x256xf32, #tpu.memory_space<vmem>>, vector<8x128xf32>,
      %c0_19 = arith.constant 0 : index
      %c128 = arith.constant 128 : index
      %21 = vector.load %arg9[%c0_19, %c128] : memref<8x256xf32, #tpu.memory_space<vmem>>, vector<8x128xf32>
      %c1 = arith.constant 1 : index
      %c0_20 = arith.constant 0 : index
      %22 = vector.load %arg6[%c1, %c0_20] : memref<2x128xf32, #tpu.memory_space<vmem>>, vector<1x128xf32>
      %23 = vector.broadcast %13 : vector<8x1xf32> to vector<8x128xf32>
      %24 = vector.broadcast %22 : vector<1x128xf32> to vector<8x128xf32>
      %25 = arith.mulf %23, %24 : vector<8x128xf32>
      %26 = arith.mulf %21, %25 : vector<8x128xf32>
      %c0_21 = arith.constant 0 : index
      %c128_22 = arith.constant 128 : index
      %27 = vector.load %arg9[%c0_21, %c128_22] : memref<8x256xf32, #tpu.memory_space<vmem>>, vector<8x128xf32>
      tpu.vector_store %arg9[%c0_21, %c128_22], %26 {strides = array<i32>} : memref<8x256xf32, #tpu.memory_space<vmem>>, vector<8x128xf32>,
      %c0_23 = arith.constant 0 : index
      %c0_24 = arith.constant 0 : index
      %28 = vector.load %arg9[%c0_23, %c0_24] : memref<8x256xf32, #tpu.memory_space<vmem>>, vector<8x128xf32>
      %c0_25 = arith.constant 0 : index
      %c128_26 = arith.constant 128 : index
      %29 = vector.load %arg9[%c0_25, %c128_26] : memref<8x256xf32, #tpu.memory_space<vmem>>, vector<8x128xf32>
      %30 = arith.maximumf %28, %29 : vector<8x128xf32>
      %cst_27 = arith.constant 0.000000e+00 : f32
      %31 = vector.broadcast %cst_27 : f32 to vector<8x128xf32>
      %cst_28 = arith.constant 0.000000e+00 : f32
      %32 = vector.broadcast %cst_28 : f32 to vector<8x128xf32>
      %c0_29 = arith.constant 0 : index
      %c0_30 = arith.constant 0 : index
      %33 = vector.load %arg9[%c0_29, %c0_30] : memref<8x256xf32, #tpu.memory_space<vmem>>, vector<8x128xf32>
      %34 = arith.subf %33, %30 : vector<8x128xf32>
      %35 = math.exp %34 : vector<8x128xf32>
      %36 = arith.addf %31, %35 : vector<8x128xf32>
      %37 = arith.mulf %35, %33 : vector<8x128xf32>
      %38 = arith.addf %32, %37 : vector<8x128xf32>
      %c0_31 = arith.constant 0 : index
      %c128_32 = arith.constant 128 : index
      %39 = vector.load %arg9[%c0_31, %c128_32] : memref<8x256xf32, #tpu.memory_space<vmem>>, vector<8x128xf32>
      %40 = arith.subf %39, %30 : vector<8x128xf32>
      %41 = math.exp %40 : vector<8x128xf32>
      %42 = arith.addf %36, %41 : vector<8x128xf32>
      %43 = arith.mulf %41, %39 : vector<8x128xf32>
      %44 = arith.addf %38, %43 : vector<8x128xf32>
      %45 = arith.divf %44, %42 : vector<8x128xf32>
      %c0_33 = arith.constant 0 : index
      %46 = memref.load %arg7[%c0_33] : memref<1xf32, #tpu.memory_space<smem>>
      %47 = vector.broadcast %46 : f32 to vector<8x128xf32>
      %48 = arith.mulf %45, %47 : vector<8x128xf32>
      %c0_34 = arith.constant 0 : index
      %c0_35 = arith.constant 0 : index
      %49 = vector.load %arg8[%c0_34, %c0_35] : memref<8x128xf32, #tpu.memory_space<vmem>>, vector<8x128xf32>
      tpu.vector_store %arg8[%c0_34, %c0_35], %48 {strides = array<i32>} : memref<8x128xf32, #tpu.memory_space<vmem>>, vector<8x128xf32>,
    } else {
    }
    return
  }
  func.func @transform_0(%arg0: i32, %arg1: i32, %arg2: i32) -> (i32, i32) {
    %c0_i32 = arith.constant 0 : i32
    return %arg0, %arg2 : i32, i32
  }
  func.func @transform_1(%arg0: i32, %arg1: i32, %arg2: i32) -> (i32, i32, i32) {
    %c0_i32 = arith.constant 0 : i32
    %c0_i32_0 = arith.constant 0 : i32
    return %c0_i32, %arg1, %arg2 : i32, i32, i32
  }
  func.func @transform_2(%arg0: i32, %arg1: i32, %arg2: i32) -> (i32, i32) {
    %c0_i32 = arith.constant 0 : i32
    %c0_i32_0 = arith.constant 0 : i32
    return %arg0, %c0_i32 : i32, i32
  }
  func.func @transform_3(%arg0: i32, %arg1: i32, %arg2: i32) -> (i32, i32) {
    %c0_i32 = arith.constant 0 : i32
    %c0_i32_0 = arith.constant 0 : i32
    return %c0_i32, %arg1 : i32, i32
  }
  func.func @transform_4(%arg0: i32, %arg1: i32, %arg2: i32) -> i32 {
    %c0_i32 = arith.constant 0 : i32
    %c0_i32_0 = arith.constant 0 : i32
    return %c0_i32 : i32
  }
  func.func @transform_5(%arg0: i32, %arg1: i32, %arg2: i32) -> (i32, i32) {
    %c0_i32 = arith.constant 0 : i32
    return %arg0, %arg1 : i32, i32
  }
}

</mosaic_0001>

<llo_original>
// kernel: tpu_custom_call.1
$region0: #{tpu_custom_call.1}
  #allocation0 [shape = 'u32[]', space=smem, size = 0x4, offset = 0x4, fixed_abs, tag = 'smem constant byte address 0x4 - core index']
  #allocation1 [shape = 'u32[144,128]{1,0:T(1,128)}', space=vmem, size = 0x12000, scoped, tag = 'internal scratch']
  #allocation2 [shape = 'f32[8,256]{1,0:T(8,128)}', space=vmem, size = 0x2000, scoped, tag = 'scratch operand']
  #allocation3 [shape = 'f32[1]{0:T(128)S(6)}', space=smem, size = 0x200, scoped, tag = 'scoped memory for tpu_custom_call.1']
  %s0 = inlined_call_operand.vmem [shape: f32[8,128], index: 0, kind: input, shape index: {}]
  %s1 = inlined_call_operand.hbm [shape: f32[2,128,128], index: 1, kind: input, shape index: {}]
  %s2 = inlined_call_operand.vmem [shape: f32[8,1], index: 2, kind: input, shape index: {}]
  %s3 = inlined_call_operand.vmem [shape: f32[2,128], index: 3, kind: input, shape index: {}]
  %s4 = inlined_call_operand.<no memory space> [shape: f32[1], index: 4, kind: input, shape index: {}]
  %s5 = inlined_call_operand.hbm [shape: f32[8,128], index: 5, kind: output, shape index: {}]
  %s6 = sld [smem:[#allocation0]]
  $region42: #{tpu_custom_call.1} parent=0
    _
  %s8 = ssub.s32 1, %s6
  %s9 = scalar_select 0, %s8, %s6
  %10 = sst [smem:[#allocation3]] %s4
  $region1: #{tpu_custom_call.1} parent=0
    #allocation4 [shape = 'u8[131072]{0}', space=vmem, size = 0x20000, scoped, tag = 'input window, operand 1, single buffered']
    #allocation5 [shape = 's32[1]{0}', space=sflag, size = 0x4, scoped, tag = 'scoped memory for tpu_custom_call.1']
    #allocation6 [shape = 's32[1]{0}', space=sflag, size = 0x4, scoped, tag = 'scoped memory for tpu_custom_call.1']
    #allocation7 [shape = 'u8[4096]{0}', space=vmem, size = 0x1000, scoped, tag = 'output window, operand 0, single buffered']
    %11 = vsyncpa [#allocation5], 0
    %12 = vsyncpa [#allocation6], 0
    // Predicated region
    $region2: #{tpu_custom_call.1} parent=1 // pred_check
      _
    $region3: #{tpu_custom_call.1} parent=1 // pred_check_branch
      %14 = sbr.rel (0) target = $region5
    $region4: #{tpu_custom_call.1} parent=1 // pred_region
      _
    $region5: #{tpu_custom_call.1} parent=1 // pred_fallthru
      _
    // Predicated region
    $region6: #{tpu_custom_call.1} parent=1 // pred_check
      _
    $region7: #{tpu_custom_call.1} parent=1 // pred_check_branch
      %16 = sbr.rel (0) target = $region9
    $region8: #{tpu_custom_call.1} parent=1 // pred_region
      %s18 = ssub.s32 4096, 4096
      %19 = vsyncadd [#allocation5], %s18
      %s20 = sshll.u32 [#allocation4], 4
      %s21 = int_to_ptr.vmem [resolvable:$true] %s20
      %26 = dma.hbm_to_vmem [thread:$0]  %s1, 4096, %s21, [#allocation5], 128, 128, 8
    $region9: #{tpu_custom_call.1} parent=1 // pred_fallthru
      _
    // Predicated region
    $region10: #{tpu_custom_call.1} parent=1 // pred_check
      _
    $region11: #{tpu_custom_call.1} parent=1 // pred_check_branch
      %28 = sbr.rel (0) target = $region13
    $region12: #{tpu_custom_call.1} parent=1 // pred_region
      _
    $region13: #{tpu_custom_call.1} parent=1 // pred_fallthru
      _
    // Predicated region
    $region14: #{tpu_custom_call.1} parent=1 // pred_check
      _
    $region15: #{tpu_custom_call.1} parent=1 // pred_check_branch
      %30 = sbr.rel (0) target = $region17
    $region16: #{tpu_custom_call.1} parent=1 // pred_region
      _
    $region17: #{tpu_custom_call.1} parent=1 // pred_fallthru
      _
    // Predicated region
    $region18: #{tpu_custom_call.1} parent=1 // pred_check
      _
    $region19: #{tpu_custom_call.1} parent=1 // pred_check_branch
      %32 = sbr.rel (0) target = $region21
    $region20: #{tpu_custom_call.1} parent=1 // pred_region
      _
    $region21: #{tpu_custom_call.1} parent=1 // pred_fallthru
      _
    // Predicated region
    $region22: #{tpu_custom_call.1} parent=1 // pred_check
      _
    $region23: #{tpu_custom_call.1} parent=1 // pred_check_branch
      %34 = sbr.rel (0) target = $region25
    $region24: #{tpu_custom_call.1} parent=1 // pred_region
      %35 = dma.done [#allocation5], 4096
    $region25: #{tpu_custom_call.1} parent=1 // pred_fallthru
      _
    %p36 = scmp.eq.s32.totalorder 0, 0
    // Predicated region
    $region26: #{tpu_custom_call.1} parent=1 // pred_check
      %p37 = pneg %p36
    $region27: #{tpu_custom_call.1} parent=1 // pred_check_branch
      %39 = sbr.rel (%p37) target = $region29
    $region28: #{tpu_custom_call.1} parent=1 // pred_region
      %40 = vst [vmem:[#allocation2] sm:$0xff] 0.0
      %41 = vst [vmem:[#allocation2 + $0x8] sm:$0xff] 0.0
    $region29: #{tpu_custom_call.1} parent=1 // pred_fallthru
      _
    %v42 = vld [vmem:[#allocation4] sm:$0xff]
    %v43 = vld [vmem:[#allocation4 + $0x8] sm:$0xff]
    %v44 = vld [vmem:[#allocation4 + $0x10] sm:$0xff]
    %v45 = vld [vmem:[#allocation4 + $0x18] sm:$0xff]
    %v46 = vld [vmem:[#allocation4 + $0x20] sm:$0xff]
    %v47 = vld [vmem:[#allocation4 + $0x28] sm:$0xff]
    %v48 = vld [vmem:[#allocation4 + $0x30] sm:$0xff]
    %v49 = vld [vmem:[#allocation4 + $0x38] sm:$0xff]
    %v50 = vld [vmem:[#allocation4 + $0x40] sm:$0xff]
    %v51 = vld [vmem:[#allocation4 + $0x48] sm:$0xff]
    %v52 = vld [vmem:[#allocation4 + $0x50] sm:$0xff]
    %v53 = vld [vmem:[#allocation4 + $0x58] sm:$0xff]
    %v54 = vld [vmem:[#allocation4 + $0x60] sm:$0xff]
    %v55 = vld [vmem:[#allocation4 + $0x68] sm:$0xff]
    %v56 = vld [vmem:[#allocation4 + $0x70] sm:$0xff]
    %v57 = vld [vmem:[#allocation4 + $0x78] sm:$0xff]
    %v58 = vld [vmem:[#allocation4 + $0x80] sm:$0xff]
    %v59 = vld [vmem:[#allocation4 + $0x88] sm:$0xff]
    %v60 = vld [vmem:[#allocation4 + $0x90] sm:$0xff]
    %v61 = vld [vmem:[#allocation4 + $0x98] sm:$0xff]
    %v62 = vld [vmem:[#allocation4 + $0xa0] sm:$0xff]
    %v63 = vld [vmem:[#allocation4 + $0xa8] sm:$0xff]
    %v64 = vld [vmem:[#allocation4 + $0xb0] sm:$0xff]
    %v65 = vld [vmem:[#allocation4 + $0xb8] sm:$0xff]
    %v66 = vld [vmem:[#allocation4 + $0xc0] sm:$0xff]
    %v67 = vld [vmem:[#allocation4 + $0xc8] sm:$0xff]
    %v68 = vld [vmem:[#allocation4 + $0xd0] sm:$0xff]
    %v69 = vld [vmem:[#allocation4 + $0xd8] sm:$0xff]
    %v70 = vld [vmem:[#allocation4 + $0xe0] sm:$0xff]
    %v71 = vld [vmem:[#allocation4 + $0xe8] sm:$0xff]
    %v72 = vld [vmem:[#allocation4 + $0xf0] sm:$0xff]
    %v73 = vld [vmem:[#allocation4 + $0xf8] sm:$0xff]
    %v74 = vld [vmem:[#allocation2] sm:$0xff]
    %v75 = vld [vmem:[#allocation2 + $0x8] sm:$0xff]
    %v76 = vld [vmem:[%s0] sm:$0xff]
    %77 = vmatprep.subr.mxu0 0.0
    %78 = vmatpush1.xpose.msra.mxu0 %v42
    %79 = vmatprep.subr.mxu0 0.0
    %80 = vmatpush1.xpose.msra.mxu0 %v43
    %81 = vmatprep.subr.mxu0 0.0
    %82 = vmatpush1.xpose.msra.mxu0 %v44
    %83 = vmatprep.subr.mxu0 0.0
    %84 = vmatpush1.xpose.msra.mxu0 %v45
    %85 = vmatprep.subr.mxu0 0.0
    %86 = vmatpush1.xpose.msra.mxu0 %v46
    %87 = vmatprep.subr.mxu0 0.0
    %88 = vmatpush1.xpose.msra.mxu0 %v47
    %89 = vmatprep.subr.mxu0 0.0
    %90 = vmatpush1.xpose.msra.mxu0 %v48
    %91 = vmatprep.subr.mxu0 0.0
    %92 = vmatpush1.xpose.msra.mxu0 %v49
    %93 = vmatprep.subr.mxu0 0.0
    %94 = vmatpush1.xpose.msra.mxu0 %v50
    %95 = vmatprep.subr.mxu0 0.0
    %96 = vmatpush1.xpose.msra.mxu0 %v51
    %97 = vmatprep.subr.mxu0 0.0
    %98 = vmatpush1.xpose.msra.mxu0 %v52
    %99 = vmatprep.subr.mxu0 0.0
    %100 = vmatpush1.xpose.msra.mxu0 %v53
    %101 = vmatprep.subr.mxu0 0.0
    %102 = vmatpush1.xpose.msra.mxu0 %v54
    %103 = vmatprep.subr.mxu0 0.0
    %104 = vmatpush1.xpose.msra.mxu0 %v55
    %105 = vmatprep.subr.mxu0 0.0
    %106 = vmatpush1.xpose.msra.mxu0 %v56
    %107 = vmatprep.subr.mxu0 0.0
    %108 = vmatpush1.xpose.msra.mxu0 %v57
    %109 = vmatprep.subr.mxu0 0.0
    %110 = vmatpush1.xpose.msra.mxu0 %v58
    %111 = vmatprep.subr.mxu0 0.0
    %112 = vmatpush1.xpose.msra.mxu0 %v59
    %113 = vmatprep.subr.mxu0 0.0
    %114 = vmatpush1.xpose.msra.mxu0 %v60
    %115 = vmatprep.subr.mxu0 0.0
    %116 = vmatpush1.xpose.msra.mxu0 %v61
    %117 = vmatprep.subr.mxu0 0.0
    %118 = vmatpush1.xpose.msra.mxu0 %v62
    %119 = vmatprep.subr.mxu0 0.0
    %120 = vmatpush1.xpose.msra.mxu0 %v63
    %121 = vmatprep.subr.mxu0 0.0
    %122 = vmatpush1.xpose.msra.mxu0 %v64
    %123 = vmatprep.subr.mxu0 0.0
    %124 = vmatpush1.xpose.msra.mxu0 %v65
    %125 = vmatprep.subr.mxu0 0.0
    %126 = vmatpush1.xpose.msra.mxu0 %v66
    %127 = vmatprep.subr.mxu0 0.0
    %128 = vmatpush1.xpose.msra.mxu0 %v67
    %129 = vmatprep.subr.mxu0 0.0
    %130 = vmatpush1.xpose.msra.mxu0 %v68
    %131 = vmatprep.subr.mxu0 0.0
    %132 = vmatpush1.xpose.msra.mxu0 %v69
    %133 = vmatprep.subr.mxu0 0.0
    %134 = vmatpush1.xpose.msra.mxu0 %v70
    %135 = vmatprep.subr.mxu0 0.0
    %136 = vmatpush1.xpose.msra.mxu0 %v71
    %137 = vmatprep.subr.mxu0 0.0
    %138 = vmatpush1.xpose.msra.mxu0 %v72
    %139 = vmatprep.subr.mxu0 0.0
    %140 = vmatpush1.xpose.msra.mxu0 %v73
    %141 = vmatprep.mubr.f32.mxu0 0.0
    %142 = vmatmul.mubr.f32.gmra.mrb[0].mxu0 %v76
    %v143 = vpop.f32.mrb[0].mxu0
    %v144 = vadd.f32 0.0, %v143
    %v145 = vpop.f32.mrb[0].mxu0
    %v146 = vadd.f32 0.0, %v145
    %147 = vdwg.mxu0
    %v148 = vadd.f32 %v74, %v144
    %v149 = vadd.f32 %v75, %v146
    %150 = vst [vmem:[#allocation2] sm:$0xff] %v148
    %151 = vst [vmem:[#allocation2 + $0x8] sm:$0xff] %v149
    // Predicated region
    $region30: #{tpu_custom_call.1} parent=1 // pred_check
      %p152 = pneg %p36
    $region31: #{tpu_custom_call.1} parent=1 // pred_check_branch
      %154 = sbr.rel (%p152) target = $region33
    $region32: #{tpu_custom_call.1} parent=1 // pred_region
      %v155 = vld [vmem:[%s2] sm:$0xff]
      %v156 = vld [vmem:[#allocation2] sm:$0xff]
      %v157 = vld [vmem:[%s3] sm:$0x1]
      %159 = vset.pattern.permute.xlu0 0
      %160 = vperm.xlu0 %159, %v155
      %v161 = vpop.permute.xlu0 %160
      %v163 = vlaneseq
      %v164 = vshrl.u32 %v163, 7
      %v165 = vsub.s32 0, %v164
      %v166 = vrot.slane %v157, %v165
      %v167 = vmul.f32 %v161, %v166
      %v168 = vmul.f32 %v156, %v167
      %169 = vst [vmem:[#allocation2] sm:$0xff] %v168
      %v170 = vld [vmem:[#allocation2 + $0x8] sm:$0xff]
      %v171 = vld [vmem:[%s3 + $0x1] sm:$0x1]
      %v172 = vlaneseq
      %v173 = vshrl.u32 %v172, 7
      %v174 = vsub.s32 0, %v173
      %v175 = vrot.slane %v171, %v174
      %v176 = vmul.f32 %v161, %v175
      %v177 = vmul.f32 %v170, %v176
      %178 = vst [vmem:[#allocation2 + $0x8] sm:$0xff] %v177
      %v179 = vld [vmem:[#allocation2] sm:$0xff]
      %v180 = vld [vmem:[#allocation2 + $0x8] sm:$0xff]
      %v181 = vmax.f32 %v179, %v180
      %v182 = vsub.f32 %v179, %v181
      %v183 = vmul.f32 %v182, 1.442695
      %v184 = vpow.pop %v183
      %v185 = vadd.f32 %v184, 0.0
      %v186 = vmul.f32 %v184, %v179
      %v187 = vadd.f32 %v186, 0.0
      %v188 = vsub.f32 %v180, %v181
      %v189 = vmul.f32 %v188, 1.442695
      %v190 = vpow.pop %v189
      %v191 = vadd.f32 %v185, %v190
      %v192 = vmul.f32 %v190, %v180
      %v193 = vadd.f32 %v187, %v192
      %v194 = vrcp.pop %v191
      %v195 = vmul.f32 %v193, %v194
      %s196 = sld [smem:[#allocation3]]
      %v197 = vstv %s196
      %v198 = vmul.f32 %v195, %v197
      %199 = vst [vmem:[#allocation7] sm:$0xff] %v198
    $region33: #{tpu_custom_call.1} parent=1 // pred_fallthru
      _
    // Predicated region
    $region34: #{tpu_custom_call.1} parent=1 // pred_check
      _
    $region35: #{tpu_custom_call.1} parent=1 // pred_check_branch
      %201 = sbr.rel (0) target = $region37
    $region36: #{tpu_custom_call.1} parent=1 // pred_region
      %s203 = ssub.s32 128, 128
      %204 = vsyncadd [#allocation6], %s203
      %s206 = sshll.u32 [#allocation7], 4
      %s207 = int_to_ptr.vmem [resolvable:$true] %s206
      %209 = dma.vmem_to_hbm [thread:$0]  %s207, 128, %s5, [#allocation6]
    $region37: #{tpu_custom_call.1} parent=1 // pred_fallthru
      _
    // Predicated region
    $region38: #{tpu_custom_call.1} parent=1 // pred_check
      _
    $region39: #{tpu_custom_call.1} parent=1 // pred_check_branch
      %211 = sbr.rel (0) target = $region41
    $region40: #{tpu_custom_call.1} parent=1 // pred_region
      %212 = dma.done [#allocation6], 128
    $region41: #{tpu_custom_call.1} parent=1 // pred_fallthru
      _
    %213 = vsyncpa [#allocation5], 1
    %214 = vsyncpa [#allocation6], 1

</llo_original>
